<compile_context>
chip_gen: v5e
topology: v5e:2x2
jax: 0.10.0
libtpu: 0.0.40
codegen_flags: <defaults>
</compile_context>

<pallas_src>
import functools

import jax
import jax.numpy as jnp
from jax.experimental import pallas as pl
from jax.experimental.pallas import tpu as pltpu


def _round_up(x, m):
    return ((x + m - 1) // m) * m


def _mlp_kernel(x_ref, w1_ref, b1_ref, w2_ref, b2_ref, o_ref):
    # x arrives f32 (no wrapper-side cast/pad pass); cast to bf16 on the VPU
    # right before the MXU -- the cast hides under the DMA/MXU pipeline.
    x_bf = x_ref[...].astype(jnp.bfloat16)
    # Layer 1: Linear(nfeats, nfeats) + Tanh. bf16 MXU inputs, f32 accumulate;
    # bias add and tanh stay in f32 (VPU/EUP).
    h = jnp.dot(x_bf, w1_ref[...], preferred_element_type=jnp.float32)
    h = jnp.tanh(h + b1_ref[...])
    # Layer 2: Linear(nfeats, outdim * num_layers) + Tanh (columns pre-permuted
    # and lane-padded once at prepare time).
    o = jnp.dot(h.astype(jnp.bfloat16), w2_ref[...],
                preferred_element_type=jnp.float32)
    o = jnp.tanh(o + b2_ref[...])
    # bf16 writeback halves the dominant HBM output stream.
    o_ref[...] = o.astype(o_ref.dtype)


def prepare_projector_params(w1, b1, w2, b2, *, num_layers):
    """One-time parameter prep. Call once at module init, reuse every forward.

    Accepts PyTorch-style 1-D biases or (1, n) biases. Returns
    (prepped_params_tuple, out2) where out2 = outdim * num_layers (unpadded).
    """
    assert num_layers in (1, 2), "original module only supports num_layers in {1, 2}"
    w1 = jnp.asarray(w1)
    w2 = jnp.asarray(w2)
    b1 = jnp.asarray(b1).reshape(1, -1)
    b2 = jnp.asarray(b2).reshape(1, -1)
    out2 = int(w2.shape[1])                      # outdim * num_layers

    # Fold the even/odd de-interleave (stack([o[:,0::2], o[:,1::2]])) into a
    # column permutation of W2/b2 so the kernel output is already
    # [layer0 cols | layer1 cols] (lane-contiguous per layer).
    if num_layers > 1:
        perm = jnp.concatenate([jnp.arange(0, out2, 2), jnp.arange(1, out2, 2)])
        w2 = w2[:, perm]
        b2 = b2[:, perm]

    # Pad output columns to a 128-lane multiple for unmasked lane-dense stores.
    out2_pad = _round_up(out2, 128)
    if out2_pad != out2:
        w2 = jnp.pad(w2, ((0, 0), (0, out2_pad - out2)))
        b2 = jnp.pad(b2, ((0, 0), (0, out2_pad - out2)))

    params = (w1.astype(jnp.bfloat16),   # bf16 MXU weights (resident in VMEM)
              b1.astype(jnp.float32),    # f32 biases (VPU add in f32)
              w2.astype(jnp.bfloat16),
              b2.astype(jnp.float32))
    return params, out2


@functools.partial(
    jax.jit,
    static_argnames=("num_layers", "out2", "max_block_b", "stack_layers"))
def image_global_features_projector(x, w1_bf, b1_f32, w2_bf, b2_f32, *,
                                    num_layers, out2, max_block_b=512,
                                    stack_layers=True):
    """x: (B, nfeats) f32 -> (num_layers, B, outdim) bf16 (or (B, outdim))."""
    B, nfeats = x.shape
    out2_pad = w2_bf.shape[1]
    outdim = out2 // num_layers

    # Row tile selection (all static, from shapes):
    #  - pad rows only to a multiple of 8 (MXU underfill is cheap; 16x wasted
    #    DMA/stores for tiny B is not),
    #  - for batches that fit one tile, split in two so v7x's 2 TensorCores
    #    both get work (harmless on 1-TC v5e/v6e),
    #  - cap at max_block_b (mem-bound kernel: 512-row tiles already sit near
    #    the HBM roofline; footprint stays < 1 MiB of VMEM).
    B8 = _round_up(B, 8)
    if B8 <= 8:
        block_b = 8
    elif B8 <= max_block_b:
        block_b = _round_up(pl.cdiv(B8, 2), 8)
    else:
        block_b = max_block_b
    B_pad = _round_up(B, block_b)
    if B_pad != B:
        x = jnp.pad(x, ((0, B_pad - B), (0, 0)))   # stays f32; no dtype pass

    grid = (B_pad // block_b,)
    out = pl.pallas_call(
        _mlp_kernel,
        out_shape=jax.ShapeDtypeStruct((B_pad, out2_pad), jnp.bfloat16),
        grid_spec=pltpu.PrefetchScalarGridSpec(
            num_scalar_prefetch=0,
            grid=grid,
            in_specs=[
                pl.BlockSpec((block_b, nfeats), lambda i: (i, 0)),    # x tile (f32)
                pl.BlockSpec((nfeats, nfeats), lambda i: (0, 0)),     # W1 (resident bf16)
                pl.BlockSpec((1, nfeats), lambda i: (0, 0)),          # b1 (f32)
                pl.BlockSpec((nfeats, out2_pad), lambda i: (0, 0)),   # W2 (resident bf16)
                pl.BlockSpec((1, out2_pad), lambda i: (0, 0)),        # b2 (f32)
            ],
            out_specs=pl.BlockSpec((block_b, out2_pad), lambda i: (i, 0)),
        ),
        compiler_params=pltpu.CompilerParams(
            dimension_semantics=("parallel",)),    # shards grid across v7x's 2 TCs
    )(x, w1_bf, b1_f32, w2_bf, b2_f32)

    out = out[:B, :out2]   # no-op when B / out2 already aligned
    if num_layers > 1:
        if stack_layers:
            # Matches the original stack([o[:,0::2], o[:,1::2]], 0). Note: this
            # transpose is a real strided HBM pass; pass stack_layers=False if
            # the consumer can take a (B, num_layers, outdim) layout instead.
            out = out.reshape(B, num_layers, outdim).transpose(1, 0, 2)
        else:
            out = out.reshape(B, num_layers, outdim)
    return out


def _reference(x, w1, b1, w2, b2, num_layers):
    h = jnp.tanh(x @ w1 + b1)
    o = jnp.tanh(h @ w2 + b2)
    if num_layers > 1:
        o = jnp.stack([o[:, 0::2], o[:, 1::2]], axis=0)
    return o


if __name__ == "__main__":
    # Module config (use_nonlinear_projection=True, dropout inactive at eval).
    num_layers = 2
    nfeats = 128
    outdim = 64

    key = jax.random.PRNGKey(0)
    kx, k1, k2, k3, k4 = jax.random.split(key, 5)

    # Deterministic synthetic parameters (PyTorch nn.Linear layout: 1-D biases).
    w1 = jax.random.normal(k1, (nfeats, nfeats), dtype=jnp.float32) * 0.05
    b1 = jax.random.normal(k2, (nfeats,), dtype=jnp.float32) * 0.05
    w2 = jax.random.normal(k3, (nfeats, outdim * num_layers), dtype=jnp.float32) * 0.05
    b2 = jax.random.normal(k4, (outdim * num_layers,), dtype=jnp.float32) * 0.05

    # One-time weight prep (cached; not re-run per forward call).
    params, out2 = prepare_projector_params(w1, b1, w2, b2, num_layers=num_layers)

    ok = True
    for batch in (8, 40):   # grid=1 tiny-tile path and grid=2 padded path
        x = jax.random.normal(kx, (batch, nfeats), dtype=jnp.float32)
        out = image_global_features_projector(
            x, *params, num_layers=num_layers, out2=out2)
        out = jax.block_until_ready(out)

        ref = _reference(x, w1, b1, w2, b2, num_layers)
        assert out.shape == (num_layers, batch, outdim), out.shape
        # bf16 MXU inputs + bf16 output (f32 accumulation) -> loosened tolerance.
        err = float(jnp.max(jnp.abs(out.astype(jnp.float32) - ref)))
        ok &= bool(jnp.allclose(out.astype(jnp.float32), ref, atol=3e-2, rtol=3e-2))
        assert ok, (batch, err)

    print("KERNEL_OK")
</pallas_src>

<mosaic_0001>
module attributes {stable_mosaic.version = 11 : i64} {
  func.func @_mlp_kernel(%arg0: i32, %arg1: memref<8x128xf32, #tpu.memory_space<vmem>>, %arg2: memref<128x128xbf16, #tpu.memory_space<vmem>>, %arg3: memref<1x128xf32, #tpu.memory_space<vmem>>, %arg4: memref<128x128xbf16, #tpu.memory_space<vmem>>, %arg5: memref<1x128xf32, #tpu.memory_space<vmem>>, %arg6: memref<8x128xbf16, #tpu.memory_space<vmem>>) attributes {dimension_semantics = [#tpu.dimension_semantics<parallel>], iteration_bounds = array<i64: 1>, scalar_prefetch = 0 : i64, scratch_operands = 0 : i64, tpu.core_type = #tpu.core_type<tc>, window_params = [{transform_indices = @transform_0, window_bounds = array<i64: 8, 128>}, {pipeline_mode = #tpu.pipeline_mode<synchronous>, transform_indices = @transform_1, window_bounds = array<i64: 128, 128>}, {pipeline_mode = #tpu.pipeline_mode<synchronous>, transform_indices = @transform_2, window_bounds = array<i64: 1, 128>}, {pipeline_mode = #tpu.pipeline_mode<synchronous>, transform_indices = @transform_3, window_bounds = array<i64: 128, 128>}, {pipeline_mode = #tpu.pipeline_mode<synchronous>, transform_indices = @transform_4, window_bounds = array<i64: 1, 128>}, {transform_indices = @transform_5, window_bounds = array<i64: 8, 128>}]} {
    %c0 = arith.constant 0 : index
    %c0_0 = arith.constant 0 : index
    %0 = vector.load %arg1[%c0, %c0_0] : memref<8x128xf32, #tpu.memory_space<vmem>>, vector<8x128xf32>
    %1 = arith.truncf %0 : vector<8x128xf32> to vector<8x128xbf16>
    %c0_1 = arith.constant 0 : index
    %c0_2 = arith.constant 0 : index
    %2 = vector.load %arg2[%c0_1, %c0_2] : memref<128x128xbf16, #tpu.memory_space<vmem>>, vector<128x128xbf16>
    %cst = arith.constant dense<0.000000e+00> : vector<8x128xf32>
    %3 = tpu.matmul %1, %2, %cst {dimension_numbers = #tpu.dot_dimension_numbers<[1], [0], [0], [1], [0, 0, 1, 1], [], []>} : vector<8x128xbf16>, vector<128x128xbf16>, vector<8x128xf32> -> vector<8x128xf32>
    %c0_3 = arith.constant 0 : index
    %c0_4 = arith.constant 0 : index
    %4 = vector.load %arg3[%c0_3, %c0_4] : memref<1x128xf32, #tpu.memory_space<vmem>>, vector<1x128xf32>
    %5 = vector.broadcast %4 : vector<1x128xf32> to vector<8x128xf32>
    %6 = arith.addf %3, %5 : vector<8x128xf32>
    %7 = math.tanh %6 : vector<8x128xf32>
    %8 = arith.truncf %7 : vector<8x128xf32> to vector<8x128xbf16>
    %c0_5 = arith.constant 0 : index
    %c0_6 = arith.constant 0 : index
    %9 = vector.load %arg4[%c0_5, %c0_6] : memref<128x128xbf16, #tpu.memory_space<vmem>>, vector<128x128xbf16>
    %cst_7 = arith.constant dense<0.000000e+00> : vector<8x128xf32>
    %10 = tpu.matmul %8, %9, %cst_7 {dimension_numbers = #tpu.dot_dimension_numbers<[1], [0], [0], [1], [0, 0, 1, 1], [], []>} : vector<8x128xbf16>, vector<128x128xbf16>, vector<8x128xf32> -> vector<8x128xf32>
    %c0_8 = arith.constant 0 : index
    %c0_9 = arith.constant 0 : index
    %11 = vector.load %arg5[%c0_8, %c0_9] : memref<1x128xf32, #tpu.memory_space<vmem>>, vector<1x128xf32>
    %12 = vector.broadcast %11 : vector<1x128xf32> to vector<8x128xf32>
    %13 = arith.addf %10, %12 : vector<8x128xf32>
    %14 = math.tanh %13 : vector<8x128xf32>
    %15 = arith.truncf %14 : vector<8x128xf32> to vector<8x128xbf16>
    %c0_10 = arith.constant 0 : index
    %c0_11 = arith.constant 0 : index
    %16 = vector.load %arg6[%c0_10, %c0_11] : memref<8x128xbf16, #tpu.memory_space<vmem>>, vector<8x128xbf16>
    tpu.vector_store %arg6[%c0_10, %c0_11], %15 {strides = array<i32>} : memref<8x128xbf16, #tpu.memory_space<vmem>>, vector<8x128xbf16>,
    return
  }
  func.func @transform_0(%arg0: i32) -> (i32, i32) {
    %c0_i32 = arith.constant 0 : i32
    %c0_i32_0 = arith.constant 0 : i32
    return %arg0, %c0_i32 : i32, i32
  }
  func.func @transform_1(%arg0: i32) -> (i32, i32) {
    %c0_i32 = arith.constant 0 : i32
    %c0_i32_0 = arith.constant 0 : i32
    %c0_i32_1 = arith.constant 0 : i32
    return %c0_i32, %c0_i32_0 : i32, i32
  }
  func.func @transform_2(%arg0: i32) -> (i32, i32) {
    %c0_i32 = arith.constant 0 : i32
    %c0_i32_0 = arith.constant 0 : i32
    %c0_i32_1 = arith.constant 0 : i32
    return %c0_i32, %c0_i32_0 : i32, i32
  }
  func.func @transform_3(%arg0: i32) -> (i32, i32) {
    %c0_i32 = arith.constant 0 : i32
    %c0_i32_0 = arith.constant 0 : i32
    %c0_i32_1 = arith.constant 0 : i32
    return %c0_i32, %c0_i32_0 : i32, i32
  }
  func.func @transform_4(%arg0: i32) -> (i32, i32) {
    %c0_i32 = arith.constant 0 : i32
    %c0_i32_0 = arith.constant 0 : i32
    %c0_i32_1 = arith.constant 0 : i32
    return %c0_i32, %c0_i32_0 : i32, i32
  }
  func.func @transform_5(%arg0: i32) -> (i32, i32) {
    %c0_i32 = arith.constant 0 : i32
    %c0_i32_0 = arith.constant 0 : i32
    return %arg0, %c0_i32 : i32, i32
  }
}

</mosaic_0001>

<llo_original>
// kernel: image_global_features_projector.1
$region0: #{image_global_features_projector.1}
  #allocation0 [shape = 'u32[]', space=smem, size = 0x4, offset = 0x4, fixed_abs, tag = 'smem constant byte address 0x4 - core index']
  #allocation1 [shape = 'u32[72,128]{1,0:T(1,128)}', space=vmem, size = 0x9000, scoped, tag = 'internal scratch']
  %s0 = inlined_call_operand.hbm [shape: f32[8,128], index: 0, kind: input, shape index: {}]
  %s1 = inlined_call_operand.hbm [shape: bf16[128,128], index: 1, kind: input, shape index: {}]
  %s2 = inlined_call_operand.vmem [shape: f32[1,128], index: 2, kind: input, shape index: {}]
  %s3 = inlined_call_operand.hbm [shape: bf16[128,128], index: 3, kind: input, shape index: {}]
  %s4 = inlined_call_operand.vmem [shape: f32[1,128], index: 4, kind: input, shape index: {}]
  %s5 = inlined_call_operand.vmem [shape: bf16[8,128], index: 5, kind: output, shape index: {}]
  %s6 = sld [smem:[#allocation0]]
  $region42: #{image_global_features_projector.1} parent=0
    _
  %s8 = ssub.s32 1, %s6
  %s9 = scalar_select 0, %s8, %s6
  $region1: #{image_global_features_projector.1} parent=0
    #allocation2 [shape = 'u8[4096]{0}', space=vmem, size = 0x1000, scoped, tag = 'input window, operand 0, single buffered']
    #allocation3 [shape = 's32[1]{0}', space=sflag, size = 0x4, scoped, tag = 'scoped memory for image_global_features_projector.1']
    #allocation4 [shape = 'u8[32768]{0}', space=vmem, size = 0x8000, scoped, tag = 'input window, operand 1, single buffered']
    #allocation5 [shape = 's32[1]{0}', space=sflag, size = 0x4, scoped, tag = 'scoped memory for image_global_features_projector.1']
    #allocation6 [shape = 'u8[32768]{0}', space=vmem, size = 0x8000, scoped, tag = 'input window, operand 3, single buffered']
    %10 = vsyncpa [#allocation3], 0
    %11 = vsyncpa [#allocation5], 0
    // Predicated region
    $region2: #{image_global_features_projector.1} parent=1 // pred_check
      _
    $region3: #{image_global_features_projector.1} parent=1 // pred_check_branch
      %13 = sbr.rel (0) target = $region5
    $region4: #{image_global_features_projector.1} parent=1 // pred_region
      %15 = vsyncadd [#allocation3], 0
      %s17 = sshll.u32 %s0, 4
      %s18 = int_to_ptr.hbm [resolvable:$true] %s17
      %s19 = sshll.u32 [#allocation2], 4
      %s20 = int_to_ptr.vmem [resolvable:$true] %s19
      %22 = dma.hbm_to_vmem [thread:$0]  %s18, 128, %s20, [#allocation3]
    $region5: #{image_global_features_projector.1} parent=1 // pred_fallthru
      _
    // Predicated region
    $region6: #{image_global_features_projector.1} parent=1 // pred_check
      _
    $region7: #{image_global_features_projector.1} parent=1 // pred_check_branch
      %24 = sbr.rel (0) target = $region9
    $region8: #{image_global_features_projector.1} parent=1 // pred_region
      %26 = vsyncadd [#allocation5], 0
      %s27 = sshll.u32 %s1, 4
      %s28 = int_to_ptr.hbm [resolvable:$true] %s27
      %s29 = sshll.u32 [#allocation4], 4
      %s30 = int_to_ptr.vmem [resolvable:$true] %s29
      %35 = dma.hbm_to_vmem [thread:$0]  %s28, 1024, %s30, [#allocation5], 64, 64, 4
    $region9: #{image_global_features_projector.1} parent=1 // pred_fallthru
      _
    // Predicated region
    $region10: #{image_global_features_projector.1} parent=1 // pred_check
      _
    $region11: #{image_global_features_projector.1} parent=1 // pred_check_branch
      %37 = sbr.rel (0) target = $region13
    $region12: #{image_global_features_projector.1} parent=1 // pred_region
      _
    $region13: #{image_global_features_projector.1} parent=1 // pred_fallthru
      _
    // Predicated region
    $region14: #{image_global_features_projector.1} parent=1 // pred_check
      _
    $region15: #{image_global_features_projector.1} parent=1 // pred_check_branch
      %39 = sbr.rel (0) target = $region17
    $region16: #{image_global_features_projector.1} parent=1 // pred_region
      %41 = vsyncadd [#allocation5], 0
      %s42 = sshll.u32 %s3, 4
      %s43 = int_to_ptr.hbm [resolvable:$true] %s42
      %s44 = sshll.u32 [#allocation6], 4
      %s45 = int_to_ptr.vmem [resolvable:$true] %s44
      %50 = dma.hbm_to_vmem [thread:$0]  %s43, 1024, %s45, [#allocation5], 64, 64, 4
    $region17: #{image_global_features_projector.1} parent=1 // pred_fallthru
      _
    // Predicated region
    $region18: #{image_global_features_projector.1} parent=1 // pred_check
      _
    $region19: #{image_global_features_projector.1} parent=1 // pred_check_branch
      %52 = sbr.rel (0) target = $region21
    $region20: #{image_global_features_projector.1} parent=1 // pred_region
      _
    $region21: #{image_global_features_projector.1} parent=1 // pred_fallthru
      _
    // Predicated region
    $region22: #{image_global_features_projector.1} parent=1 // pred_check
      _
    $region23: #{image_global_features_projector.1} parent=1 // pred_check_branch
      %54 = sbr.rel (0) target = $region25
    $region24: #{image_global_features_projector.1} parent=1 // pred_region
      %56 = dma.done [#allocation3], 128
    $region25: #{image_global_features_projector.1} parent=1 // pred_fallthru
      _
    // Predicated region
    $region26: #{image_global_features_projector.1} parent=1 // pred_check
      _
    $region27: #{image_global_features_projector.1} parent=1 // pred_check_branch
      %58 = sbr.rel (0) target = $region29
    $region28: #{image_global_features_projector.1} parent=1 // pred_region
      %60 = dma.done [#allocation5], 1024
    $region29: #{image_global_features_projector.1} parent=1 // pred_fallthru
      _
    // Predicated region
    $region30: #{image_global_features_projector.1} parent=1 // pred_check
      _
    $region31: #{image_global_features_projector.1} parent=1 // pred_check_branch
      %62 = sbr.rel (0) target = $region33
    $region32: #{image_global_features_projector.1} parent=1 // pred_region
      %64 = dma.done [#allocation5], 1024
    $region33: #{image_global_features_projector.1} parent=1 // pred_fallthru
      _
    %v65 = vld [vmem:[#allocation2] sm:$0xff]
    %v66 = vpack.c.bf16 %v65, %v65
    %v67 = vld [vmem:[#allocation4] sm:$0xf]
    %v68 = vld [vmem:[#allocation4 + $0x4] sm:$0xf]
    %v69 = vld [vmem:[#allocation4 + $0x8] sm:$0xf]
    %v70 = vld [vmem:[#allocation4 + $0xc] sm:$0xf]
    %v71 = vld [vmem:[#allocation4 + $0x10] sm:$0xf]
    %v72 = vld [vmem:[#allocation4 + $0x14] sm:$0xf]
    %v73 = vld [vmem:[#allocation4 + $0x18] sm:$0xf]
    %v74 = vld [vmem:[#allocation4 + $0x1c] sm:$0xf]
    %v75 = vld [vmem:[#allocation4 + $0x20] sm:$0xf]
    %v76 = vld [vmem:[#allocation4 + $0x24] sm:$0xf]
    %v77 = vld [vmem:[#allocation4 + $0x28] sm:$0xf]
    %v78 = vld [vmem:[#allocation4 + $0x2c] sm:$0xf]
    %v79 = vld [vmem:[#allocation4 + $0x30] sm:$0xf]
    %v80 = vld [vmem:[#allocation4 + $0x34] sm:$0xf]
    %v81 = vld [vmem:[#allocation4 + $0x38] sm:$0xf]
    %v82 = vld [vmem:[#allocation4 + $0x3c] sm:$0xf]
    %v83 = vld [vmem:[%s2] sm:$0x1]
    %v85 = vperm.slane %v83, 0
    %v103 = vunpack.c.l.b16 %v67
    %v104 = vunpack.c.l.b16 %v68
    %v105 = vunpack.c.l.b16 %v69
    %v106 = vunpack.c.l.b16 %v70
    %v107 = vunpack.c.l.b16 %v71
    %v108 = vunpack.c.l.b16 %v72
    %v109 = vunpack.c.l.b16 %v73
    %v110 = vunpack.c.l.b16 %v74
    %v111 = vunpack.c.l.b16 %v75
    %v112 = vunpack.c.l.b16 %v76
    %v113 = vunpack.c.l.b16 %v77
    %v114 = vunpack.c.l.b16 %v78
    %v115 = vunpack.c.l.b16 %v79
    %v116 = vunpack.c.l.b16 %v80
    %v117 = vunpack.c.l.b16 %v81
    %v118 = vunpack.c.l.b16 %v82
    %v119 = vpack.c.b16 %v104, %v103
    %v120 = vpack.c.b16 %v106, %v105
    %v121 = vpack.c.b16 %v108, %v107
    %v122 = vpack.c.b16 %v110, %v109
    %v123 = vpack.c.b16 %v112, %v111
    %v124 = vpack.c.b16 %v114, %v113
    %v125 = vpack.c.b16 %v116, %v115
    %v126 = vpack.c.b16 %v118, %v117
    %135 = vmatpush.bf16.msra.mxu0 %v126
    %136 = vmatpush.bf16.msra.mxu0 %v125
    %137 = vmatpush.bf16.msra.mxu0 %v124
    %138 = vmatpush.bf16.msra.mxu0 %v123
    %139 = vmatpush.bf16.msra.mxu0 %v122
    %140 = vmatpush.bf16.msra.mxu0 %v121
    %141 = vmatpush.bf16.msra.mxu0 %v120
    %142 = vmatpush.bf16.msra.mxu0 %v119
    %143 = vmatmul.bf16.gmra.mxu0 %v66
    %v144 = vpop.f32.mrf.mxu0
    %v145 = vadd.f32 %v85, %v144
    %v146 = vpop.f32.mrf.mxu0
    %147 = vdwg.mxu0
    %v148 = vtanh.pop %v145
    %v149 = vpack.c.bf16 %v148, %v148
    %v150 = vld [vmem:[#allocation6] sm:$0xf]
    %v151 = vld [vmem:[#allocation6 + $0x4] sm:$0xf]
    %v152 = vld [vmem:[#allocation6 + $0x8] sm:$0xf]
    %v153 = vld [vmem:[#allocation6 + $0xc] sm:$0xf]
    %v154 = vld [vmem:[#allocation6 + $0x10] sm:$0xf]
    %v155 = vld [vmem:[#allocation6 + $0x14] sm:$0xf]
    %v156 = vld [vmem:[#allocation6 + $0x18] sm:$0xf]
    %v157 = vld [vmem:[#allocation6 + $0x1c] sm:$0xf]
    %v158 = vld [vmem:[#allocation6 + $0x20] sm:$0xf]
    %v159 = vld [vmem:[#allocation6 + $0x24] sm:$0xf]
    %v160 = vld [vmem:[#allocation6 + $0x28] sm:$0xf]
    %v161 = vld [vmem:[#allocation6 + $0x2c] sm:$0xf]
    %v162 = vld [vmem:[#allocation6 + $0x30] sm:$0xf]
    %v163 = vld [vmem:[#allocation6 + $0x34] sm:$0xf]
    %v164 = vld [vmem:[#allocation6 + $0x38] sm:$0xf]
    %v165 = vld [vmem:[#allocation6 + $0x3c] sm:$0xf]
    %v166 = vld [vmem:[%s4] sm:$0x1]
    %v168 = vperm.slane %v166, 0
    %v186 = vunpack.c.l.b16 %v150
    %v187 = vunpack.c.l.b16 %v151
    %v188 = vunpack.c.l.b16 %v152
    %v189 = vunpack.c.l.b16 %v153
    %v190 = vunpack.c.l.b16 %v154
    %v191 = vunpack.c.l.b16 %v155
    %v192 = vunpack.c.l.b16 %v156
    %v193 = vunpack.c.l.b16 %v157
    %v194 = vunpack.c.l.b16 %v158
    %v195 = vunpack.c.l.b16 %v159
    %v196 = vunpack.c.l.b16 %v160
    %v197 = vunpack.c.l.b16 %v161
    %v198 = vunpack.c.l.b16 %v162
    %v199 = vunpack.c.l.b16 %v163
    %v200 = vunpack.c.l.b16 %v164
    %v201 = vunpack.c.l.b16 %v165
    %v202 = vpack.c.b16 %v187, %v186
    %v203 = vpack.c.b16 %v189, %v188
    %v204 = vpack.c.b16 %v191, %v190
    %v205 = vpack.c.b16 %v193, %v192
    %v206 = vpack.c.b16 %v195, %v194
    %v207 = vpack.c.b16 %v197, %v196
    %v208 = vpack.c.b16 %v199, %v198
    %v209 = vpack.c.b16 %v201, %v200
    %218 = vmatpush.bf16.msra.mxu0 %v209
    %219 = vmatpush.bf16.msra.mxu0 %v208
    %220 = vmatpush.bf16.msra.mxu0 %v207
    %221 = vmatpush.bf16.msra.mxu0 %v206
    %222 = vmatpush.bf16.msra.mxu0 %v205
    %223 = vmatpush.bf16.msra.mxu0 %v204
    %224 = vmatpush.bf16.msra.mxu0 %v203
    %225 = vmatpush.bf16.msra.mxu0 %v202
    %226 = vmatmul.bf16.gmra.mxu0 %v149
    %v227 = vpop.f32.mrf.mxu0
    %v228 = vadd.f32 %v168, %v227
    %v229 = vpop.f32.mrf.mxu0
    %230 = vdwg.mxu0
    %v231 = vtanh.pop %v228
    %v232 = vpack.c.bf16 %v231, %v231
    %233 = vst [vmem:[%s5] sm:$0xf] %v232
    // Predicated region
    $region34: #{image_global_features_projector.1} parent=1 // pred_check
      _
    $region35: #{image_global_features_projector.1} parent=1 // pred_check_branch
      %235 = sbr.rel (0) target = $region37
    $region36: #{image_global_features_projector.1} parent=1 // pred_region
      _
    $region37: #{image_global_features_projector.1} parent=1 // pred_fallthru
      _
    // Predicated region
    $region38: #{image_global_features_projector.1} parent=1 // pred_check
      _
    $region39: #{image_global_features_projector.1} parent=1 // pred_check_branch
      %237 = sbr.rel (0) target = $region41
    $region40: #{image_global_features_projector.1} parent=1 // pred_region
      _
    $region41: #{image_global_features_projector.1} parent=1 // pred_fallthru
      _
    %238 = vsyncpa [#allocation3], 1
    %239 = vsyncpa [#allocation5], 1

</llo_original>
